<compile_context>
chip_gen: v6e
topology: v6e:2x2x1
jax: 0.10.0
libtpu: 0.0.40
codegen_flags: <defaults>
</compile_context>

<pallas_src>
from functools import partial

import jax
import jax.numpy as jnp
from jax import lax
from jax.experimental import pallas as pl
from jax.experimental.pallas import tpu as pltpu


# --------------------------------------------------------------------------------------
# helpers
# --------------------------------------------------------------------------------------

def _round_up(x, m):
    return ((x + m - 1) // m) * m


def _vmem_capacity_bytes():
    """Physical VMEM per TensorCore; generation-aware fallback when the query fails."""
    try:
        info = pltpu.get_tpu_info()
        cap = getattr(info, "vmem_capacity_bytes", None)
        if cap:
            return int(cap)
    except Exception:
        pass
    try:
        kind = jax.devices()[0].device_kind.lower()
    except Exception:
        kind = ""
    if "v7" in kind:
        return 64 * 1024 * 1024       # v7x: 64 MiB per TensorCore
    return 128 * 1024 * 1024          # v5e / v6e (and earlier): 128 MiB


# --------------------------------------------------------------------------------------
# kernels
# --------------------------------------------------------------------------------------

def _gln_slab_kernel(y_ref, gamma_ref, beta_ref, o_ref, *, inv_count, eps, chunk):
    """Single-slab gLN for one batch element (1 HBM read + 1 HBM write of y).

    y_ref:     (1, N, K)  input slab (true, possibly unaligned shape)
    gamma_ref: (N, 1) f32 per-channel scale
    beta_ref:  (N, 1) f32 per-channel shift
    o_ref:     (1, N, K)  output slab

    Stats and normalize are chunked over K so only a (N, chunk) fp32 working set is
    live at any time (no full-slab fp32 temporary -> smaller VMEM footprint).
    """
    K = y_ref.shape[2]
    n_full = K // chunk          # static Python ints (trace-time)
    rem = K - n_full * chunk

    zero = jnp.zeros((1, 1), jnp.float32)
    s, ss = zero, zero

    # ---- fused sum / sum-of-squares pass (fp32 accumulation, chunked over K) ----
    if n_full > 0:
        def stats_body(i, carry):
            cs, css = carry
            start = pl.multiple_of(i * chunk, 128)
            yc = y_ref[0, :, pl.ds(start, chunk)].astype(jnp.float32)   # (N, chunk)
            return cs + jnp.sum(yc), css + jnp.sum(yc * yc)

        s, ss = lax.fori_loop(0, n_full, stats_body, (s, ss))
    if rem:
        yt = y_ref[0, :, K - rem:].astype(jnp.float32)                  # (N, rem)
        s = s + jnp.sum(yt)
        ss = ss + jnp.sum(yt * yt)

    mean = s * inv_count                                                # (1, 1)
    # var = E[x^2] - mean^2 with fp32 accumulation; clamp guards catastrophic cancellation.
    var = jnp.maximum(ss * inv_count - mean * mean, 0.0)
    inv_std = lax.rsqrt(var + eps)                                      # EUP

    # ---- fold affine into 2 VALU ops / element ----
    scale = gamma_ref[...] * inv_std                                    # (N, 1)
    shift = beta_ref[...] - mean * scale                                # (N, 1)

    if n_full > 0:
        @pl.loop(0, n_full)
        def _(i):
            start = pl.multiple_of(i * chunk, 128)
            yc = y_ref[0, :, pl.ds(start, chunk)].astype(jnp.float32)
            o_ref[0, :, pl.ds(start, chunk)] = (yc * scale + shift).astype(o_ref.dtype)
    if rem:
        yt = y_ref[0, :, K - rem:].astype(jnp.float32)
        o_ref[0, :, K - rem:] = (yt * scale + shift).astype(o_ref.dtype)


def _gln_fused_kernel(y_ref, gamma_ref, beta_ref, o_ref,
                      s_ref, ss_ref, scale_ref, shift_ref,
                      *, inv_count, eps, k_len, tk):
    """Fused two-phase gLN for one (batch, phase, K-tile) grid step.

    grid = (M, 2, nk).  Phase 0: accumulate sum / sum-of-squares of the K tiles into
    VMEM scratch.  Phase 1: at k==0 fold mean/inv_std with resident gamma/beta into
    scale/shift scratch, then normalize each K tile.  Output blocks are only written
    (and hence only flushed) during phase 1.
    """
    p = pl.program_id(1)
    k = pl.program_id(2)
    ragged = (k_len % tk) != 0       # static: masking code only emitted when needed

    @pl.when(p == 0)
    def _stats():
        @pl.when(k == 0)
        def _():
            s_ref[...] = jnp.zeros_like(s_ref)
            ss_ref[...] = jnp.zeros_like(ss_ref)

        y = y_ref[0].astype(jnp.float32)                       # (N, tk)
        if ragged:
            col = lax.broadcasted_iota(jnp.int32, y.shape, 1)
            y = jnp.where(col < (k_len - k * tk), y, 0.0)      # zero OOB lanes of last tile
        s_ref[...] = s_ref[...] + jnp.sum(y)
        ss_ref[...] = ss_ref[...] + jnp.sum(y * y)

    @pl.when(p == 1)
    def _apply():
        @pl.when(k == 0)
        def _():
            mean = s_ref[...] * inv_count                      # (1, 1)
            var = jnp.maximum(ss_ref[...] * inv_count - mean * mean, 0.0)
            inv_std = lax.rsqrt(var + eps)
            scale_ref[...] = gamma_ref[...] * inv_std          # (N, 1)
            shift_ref[...] = beta_ref[...] - mean * scale_ref[...]

        y = y_ref[0].astype(jnp.float32)                       # (N, tk)
        # OOB lanes of the last tile produce garbage here, but Pallas discards OOB writes.
        o_ref[0] = (y * scale_ref[...] + shift_ref[...]).astype(o_ref.dtype)


# --------------------------------------------------------------------------------------
# wrapper
# --------------------------------------------------------------------------------------

def global_layer_norm(y, gamma, beta, *, eps=1e-7, force_two_phase=False, tile_k=None):
    """gLN(y). y: [M, N, K]; gamma, beta: [1, N, 1]. Returns [M, N, K] in y.dtype."""
    M, N, K = y.shape
    assert gamma.shape == (1, N, 1) and beta.shape == (1, N, 1)
    dtype = y.dtype
    itemsize = jnp.dtype(dtype).itemsize
    count = N * K

    gamma_c = gamma.reshape(N, 1).astype(jnp.float32)
    beta_c = beta.reshape(N, 1).astype(jnp.float32)

    cap = _vmem_capacity_bytes()

    # Internal (tiled-layout) footprint estimates for VMEM budgeting only — no HBM padding.
    sub_mult = max(8, 32 // itemsize)            # 8 for f32, 16 for bf16, 32 for int8
    N_t = _round_up(N, sub_mult)
    K_t = _round_up(K, 128)
    slab_vmem = N_t * K_t * itemsize

    # Chunk for the in-kernel stats/normalize loops of the slab path.
    chunk = max(128, min(1024, (K // 128) * 128))
    chunk_vmem = N_t * chunk * 4                 # fp32 chunk temporaries

    # Double-buffered in + out slabs, fp32 chunk temps, small slack.
    single_need = 4 * slab_vmem + 4 * chunk_vmem + (1 << 20)
    use_single = (not force_two_phase) and single_need <= int(0.75 * cap)

    if use_single:
        # -------- single-slab path: 1 HBM read + 1 HBM write of y, no pad/slice --------
        vmem_limit = int(min(0.85 * cap, max(single_need + (4 << 20), 32 << 20)))
        return pl.pallas_call(
            partial(_gln_slab_kernel, inv_count=1.0 / count, eps=float(eps), chunk=chunk),
            out_shape=jax.ShapeDtypeStruct((M, N, K), dtype),
            grid_spec=pltpu.PrefetchScalarGridSpec(
                num_scalar_prefetch=0,
                grid=(M,),
                in_specs=[
                    pl.BlockSpec((1, N, K), lambda m: (m, 0, 0)),
                    pl.BlockSpec((N, 1), lambda m: (0, 0)),
                    pl.BlockSpec((N, 1), lambda m: (0, 0)),
                ],
                out_specs=pl.BlockSpec((1, N, K), lambda m: (m, 0, 0)),
            ),
            compiler_params=pltpu.CompilerParams(
                dimension_semantics=("parallel",),
                vmem_limit_bytes=vmem_limit,
            ),
        )(y, gamma_c, beta_c)

    # -------- fused two-phase K-tiled fallback (slab too big for VMEM) --------
    if tile_k is not None:
        tk = int(tile_k)
        assert tk > 0 and tk % 128 == 0, "tile_k must be a positive multiple of 128"
    else:
        target_bytes = 2 << 20                                   # ~2 MiB lane-dense blocks
        tk = _round_up(max(512, target_bytes // max(1, N_t * itemsize)), 128)
    per_lane_col = N_t * (4 * itemsize + 8)                      # 2 in + 2 out bufs + fp32 temps
    max_tk = max(128, (int((0.6 * cap) // per_lane_col) // 128) * 128)
    tk = max(128, min(tk, max_tk, _round_up(K, 128)))
    nk = pl.cdiv(K, tk)

    need = N_t * tk * (4 * itemsize + 2 * 4) + (2 << 20)
    vm = int(min(0.85 * cap, max(int(1.25 * need), 32 << 20)))

    return pl.pallas_call(
        partial(_gln_fused_kernel, inv_count=1.0 / count, eps=float(eps), k_len=K, tk=tk),
        out_shape=jax.ShapeDtypeStruct((M, N, K), dtype),
        grid_spec=pltpu.PrefetchScalarGridSpec(
            num_scalar_prefetch=0,
            grid=(M, 2, nk),
            in_specs=[
                pl.BlockSpec((1, N, tk), lambda m, p, k: (m, 0, k)),
                pl.BlockSpec((N, 1), lambda m, p, k: (0, 0)),
                pl.BlockSpec((N, 1), lambda m, p, k: (0, 0)),
            ],
            # Phase 0 parks the (never-written, never-flushed) out block at k=0; phase 1
            # walks the K tiles, so each output block is written exactly once.
            out_specs=pl.BlockSpec((1, N, tk), lambda m, p, k: (m, 0, k * p)),
            scratch_shapes=[
                pltpu.VMEM((1, 1), jnp.float32),    # sum
                pltpu.VMEM((1, 1), jnp.float32),    # sum of squares
                pltpu.VMEM((N, 1), jnp.float32),    # folded scale
                pltpu.VMEM((N, 1), jnp.float32),    # folded shift
            ],
        ),
        compiler_params=pltpu.CompilerParams(
            dimension_semantics=("parallel", "arbitrary", "arbitrary"),
            vmem_limit_bytes=vm,
        ),
    )(y, gamma_c, beta_c)


# --------------------------------------------------------------------------------------
# reference + test
# --------------------------------------------------------------------------------------

def _reference_gln(y, gamma, beta):
    # Pure-JAX reference mirroring the PyTorch forward exactly.
    mean = y.mean(axis=1, keepdims=True).mean(axis=2, keepdims=True)
    var = ((y - mean) ** 2).mean(axis=1, keepdims=True).mean(axis=2, keepdims=True)
    return gamma * (y - mean) / jnp.power(var + 1e-7, 0.5) + beta


if __name__ == "__main__":
    key = jax.random.PRNGKey(0)
    k1, k2, k3, k4, k5, k6, k7 = jax.random.split(key, 7)

    # Case 1: aligned shapes, default-initialized params (gamma=1, beta=0), slab path.
    M, N, K = 2, 8, 128
    y1 = jax.random.normal(k1, (M, N, K), dtype=jnp.float32)
    g1 = jnp.ones((1, N, 1), dtype=jnp.float32)
    b1 = jnp.zeros((1, N, 1), dtype=jnp.float32)
    o1 = jax.block_until_ready(global_layer_norm(y1, g1, b1))
    r1 = _reference_gln(y1, g1, b1)
    assert o1.shape == (M, N, K)
    assert jnp.allclose(o1, r1, atol=1e-5, rtol=1e-5)

    # Case 2: unaligned N and K (tail-only stats path), non-trivial affine, no pad/slice.
    M2, N2, K2 = 2, 6, 100
    y2 = jax.random.normal(k2, (M2, N2, K2), dtype=jnp.float32)
    g2 = 1.0 + 0.1 * jax.random.normal(k3, (1, N2, 1), dtype=jnp.float32)
    b2 = 0.1 * jax.random.normal(k4, (1, N2, 1), dtype=jnp.float32)
    o2 = jax.block_until_ready(global_layer_norm(y2, g2, b2))
    r2 = _reference_gln(y2, g2, b2)
    assert o2.shape == (M2, N2, K2)
    assert jnp.allclose(o2, r2, atol=1e-5, rtol=1e-5)

    # Case 3: unaligned K exercising chunk loop + ragged tail in the slab kernel.
    M3, N3, K3 = 2, 8, 300
    y3 = jax.random.normal(k5, (M3, N3, K3), dtype=jnp.float32)
    g3 = 1.0 + 0.1 * jax.random.normal(k3, (1, N3, 1), dtype=jnp.float32)
    b3 = 0.1 * jax.random.normal(k4, (1, N3, 1), dtype=jnp.float32)
    o3 = jax.block_until_ready(global_layer_norm(y3, g3, b3))
    r3 = _reference_gln(y3, g3, b3)
    assert o3.shape == (M3, N3, K3)
    assert jnp.allclose(o3, r3, atol=1e-5, rtol=1e-5)

    # Case 4: force the fused two-phase fallback with a ragged last K tile (mask path).
    M4, N4, K4 = 2, 8, 200
    y4 = jax.random.normal(k6, (M4, N4, K4), dtype=jnp.float32)
    g4 = 1.0 + 0.1 * jax.random.normal(k3, (1, N4, 1), dtype=jnp.float32)
    b4 = 0.1 * jax.random.normal(k4, (1, N4, 1), dtype=jnp.float32)
    o4 = jax.block_until_ready(
        global_layer_norm(y4, g4, b4, force_two_phase=True, tile_k=128))
    r4 = _reference_gln(y4, g4, b4)
    assert o4.shape == (M4, N4, K4)
    assert jnp.allclose(o4, r4, atol=1e-5, rtol=1e-5)

    # Case 5: fused two-phase fallback with K divisible by the tile (no mask path).
    M5, N5, K5 = 2, 8, 256
    y5 = jax.random.normal(k7, (M5, N5, K5), dtype=jnp.float32)
    g5 = 1.0 + 0.1 * jax.random.normal(k3, (1, N5, 1), dtype=jnp.float32)
    b5 = 0.1 * jax.random.normal(k4, (1, N5, 1), dtype=jnp.float32)
    o5 = jax.block_until_ready(
        global_layer_norm(y5, g5, b5, force_two_phase=True, tile_k=128))
    r5 = _reference_gln(y5, g5, b5)
    assert o5.shape == (M5, N5, K5)
    assert jnp.allclose(o5, r5, atol=1e-5, rtol=1e-5)

    print("KERNEL_OK")
</pallas_src>

<mosaic_0001>
module attributes {stable_mosaic.version = 11 : i64} {
  func.func @_gln_slab_kernel(%arg0: i32, %arg1: memref<1x8x128xf32, #tpu.memory_space<vmem>>, %arg2: memref<8x1xf32, #tpu.memory_space<vmem>>, %arg3: memref<8x1xf32, #tpu.memory_space<vmem>>, %arg4: memref<1x8x128xf32, #tpu.memory_space<vmem>>) attributes {dimension_semantics = [#tpu.dimension_semantics<parallel>], iteration_bounds = array<i64: 2>, scalar_prefetch = 0 : i64, scratch_operands = 0 : i64, tpu.core_type = #tpu.core_type<tc>, window_params = [{transform_indices = @transform_0, window_bounds = array<i64: 1, 8, 128>}, {pipeline_mode = #tpu.pipeline_mode<synchronous>, transform_indices = @transform_1, window_bounds = array<i64: 8, 1>}, {pipeline_mode = #tpu.pipeline_mode<synchronous>, transform_indices = @transform_2, window_bounds = array<i64: 8, 1>}, {transform_indices = @transform_3, window_bounds = array<i64: 1, 8, 128>}]} {
    %cst = arith.constant 0.000000e+00 : f32
    %0 = vector.broadcast %cst : f32 to vector<1x1xf32>
    %c0_i32 = arith.constant 0 : i32
    %c128_i32 = arith.constant 128 : i32
    %1 = arith.muli %c0_i32, %c128_i32 : i32
    %2 = tpu.assume_multiple %1, 128 : i32
    %c0 = arith.constant 0 : index
    %c0_0 = arith.constant 0 : index
    %3 = arith.index_cast %2 : i32 to index
    %4 = vector.load %arg1[%c0, %c0_0, %3] : memref<1x8x128xf32, #tpu.memory_space<vmem>>, vector<1x8x128xf32>
    %5 = vector.shape_cast %4 : vector<1x8x128xf32> to vector<8x128xf32>
    %6 = vector.shape_cast %5 : vector<8x128xf32> to vector<1x8x128xf32>
    %cst_1 = arith.constant dense<0.000000e+00> : vector<1xf32>
    %7 = vector.multi_reduction <add>, %6, %cst_1 [1, 2] : vector<1x8x128xf32> to vector<1xf32>
    %8 = vector.shape_cast %7 : vector<1xf32> to vector<1x1x1xf32>
    %9 = vector.extract %8[0, 0, 0] : f32 from vector<1x1x1xf32>
    %10 = vector.broadcast %9 : f32 to vector<1x1xf32>
    %11 = arith.addf %0, %10 : vector<1x1xf32>
    %12 = arith.mulf %5, %5 : vector<8x128xf32>
    %13 = vector.shape_cast %12 : vector<8x128xf32> to vector<1x8x128xf32>
    %cst_2 = arith.constant dense<0.000000e+00> : vector<1xf32>
    %14 = vector.multi_reduction <add>, %13, %cst_2 [1, 2] : vector<1x8x128xf32> to vector<1xf32>
    %15 = vector.shape_cast %14 : vector<1xf32> to vector<1x1x1xf32>
    %16 = vector.extract %15[0, 0, 0] : f32 from vector<1x1x1xf32>
    %17 = vector.broadcast %16 : f32 to vector<1x1xf32>
    %18 = arith.addf %0, %17 : vector<1x1xf32>
    %c1_i32 = arith.constant 1 : i32
    %cst_3 = arith.constant 9.765625E-4 : f32
    %19 = vector.broadcast %cst_3 : f32 to vector<1x1xf32>
    %20 = arith.mulf %11, %19 : vector<1x1xf32>
    %cst_4 = arith.constant 9.765625E-4 : f32
    %21 = vector.broadcast %cst_4 : f32 to vector<1x1xf32>
    %22 = arith.mulf %18, %21 : vector<1x1xf32>
    %23 = arith.mulf %20, %20 : vector<1x1xf32>
    %24 = arith.subf %22, %23 : vector<1x1xf32>
    %cst_5 = arith.constant 0.000000e+00 : f32
    %25 = vector.broadcast %cst_5 : f32 to vector<1x1xf32>
    %26 = arith.maximumf %24, %25 : vector<1x1xf32>
    %cst_6 = arith.constant 1.000000e-07 : f32
    %27 = vector.broadcast %cst_6 : f32 to vector<1x1xf32>
    %28 = arith.addf %26, %27 : vector<1x1xf32>
    %29 = math.rsqrt %28 : vector<1x1xf32>
    %c0_7 = arith.constant 0 : index
    %c0_8 = arith.constant 0 : index
    %30 = vector.load %arg2[%c0_7, %c0_8] : memref<8x1xf32, #tpu.memory_space<vmem>>, vector<8x1xf32>
    %31 = vector.broadcast %29 : vector<1x1xf32> to vector<8x1xf32>
    %32 = arith.mulf %30, %31 : vector<8x1xf32>
    %c0_9 = arith.constant 0 : index
    %c0_10 = arith.constant 0 : index
    %33 = vector.load %arg3[%c0_9, %c0_10] : memref<8x1xf32, #tpu.memory_space<vmem>>, vector<8x1xf32>
    %34 = vector.broadcast %20 : vector<1x1xf32> to vector<8x1xf32>
    %35 = arith.mulf %34, %32 : vector<8x1xf32>
    %36 = arith.subf %33, %35 : vector<8x1xf32>
    %c0_i32_11 = arith.constant 0 : i32
    %c1_i32_12 = arith.constant 1 : i32
    %37 = arith.muli %c0_i32_11, %c1_i32_12 : i32
    %c0_i32_13 = arith.constant 0 : i32
    %38 = arith.addi %c0_i32_13, %37 : i32
    %c128_i32_14 = arith.constant 128 : i32
    %39 = arith.muli %38, %c128_i32_14 : i32
    %40 = tpu.assume_multiple %39, 128 : i32
    %c0_15 = arith.constant 0 : index
    %c0_16 = arith.constant 0 : index
    %41 = arith.index_cast %40 : i32 to index
    %42 = vector.load %arg1[%c0_15, %c0_16, %41] : memref<1x8x128xf32, #tpu.memory_space<vmem>>, vector<1x8x128xf32>
    %43 = vector.shape_cast %42 : vector<1x8x128xf32> to vector<8x128xf32>
    %44 = vector.broadcast %32 : vector<8x1xf32> to vector<8x128xf32>
    %45 = arith.mulf %43, %44 : vector<8x128xf32>
    %46 = vector.broadcast %36 : vector<8x1xf32> to vector<8x128xf32>
    %47 = arith.addf %45, %46 : vector<8x128xf32>
    %c0_17 = arith.constant 0 : index
    %c0_18 = arith.constant 0 : index
    %48 = arith.index_cast %40 : i32 to index
    %49 = vector.load %arg4[%c0_17, %c0_18, %48] : memref<1x8x128xf32, #tpu.memory_space<vmem>>, vector<1x8x128xf32>
    %50 = vector.shape_cast %49 : vector<1x8x128xf32> to vector<8x128xf32>
    %51 = vector.shape_cast %47 : vector<8x128xf32> to vector<1x8x128xf32>
    tpu.vector_store %arg4[%c0_17, %c0_18, %48], %51 {strides = array<i32>} : memref<1x8x128xf32, #tpu.memory_space<vmem>>, vector<1x8x128xf32>,
    %c1_i32_19 = arith.constant 1 : i32
    return
  }
  func.func @transform_0(%arg0: i32) -> (i32, i32, i32) {
    %c0_i32 = arith.constant 0 : i32
    %c0_i32_0 = arith.constant 0 : i32
    %c0_i32_1 = arith.constant 0 : i32
    return %arg0, %c0_i32, %c0_i32_0 : i32, i32, i32
  }
  func.func @transform_1(%arg0: i32) -> (i32, i32) {
    %c0_i32 = arith.constant 0 : i32
    %c0_i32_0 = arith.constant 0 : i32
    %c0_i32_1 = arith.constant 0 : i32
    return %c0_i32, %c0_i32_0 : i32, i32
  }
  func.func @transform_2(%arg0: i32) -> (i32, i32) {
    %c0_i32 = arith.constant 0 : i32
    %c0_i32_0 = arith.constant 0 : i32
    %c0_i32_1 = arith.constant 0 : i32
    return %c0_i32, %c0_i32_0 : i32, i32
  }
  func.func @transform_3(%arg0: i32) -> (i32, i32, i32) {
    %c0_i32 = arith.constant 0 : i32
    %c0_i32_0 = arith.constant 0 : i32
    %c0_i32_1 = arith.constant 0 : i32
    return %arg0, %c0_i32, %c0_i32_0 : i32, i32, i32
  }
}

</mosaic_0001>

<llo_original>
// kernel: tpu_custom_call.1
$region0: #{tpu_custom_call.1}
  #allocation0 [shape = 'u32[]', space=smem, size = 0x4, offset = 0x4, fixed_abs, tag = 'smem constant byte address 0x4 - core index']
  #allocation1 [shape = 'u32[144,128]{1,0:T(1,128)}', space=vmem, size = 0x12000, scoped, tag = 'internal scratch']
  %s0 = inlined_call_operand.vmem [shape: f32[2,8,128], index: 0, kind: input, shape index: {}]
  %s1 = inlined_call_operand.vmem [shape: f32[8,1], index: 1, kind: input, shape index: {}]
  %s2 = inlined_call_operand.vmem [shape: f32[8,1], index: 2, kind: input, shape index: {}]
  %s3 = inlined_call_operand.hbm [shape: f32[2,8,128], index: 3, kind: output, shape index: {}]
  %s4 = sld [smem:[#allocation0]]
  $region45: #{tpu_custom_call.1} parent=0
    _
  %s6 = ssub.s32 1, %s4
  %s7 = scalar_select 0, %s6, %s4
  $region1: #{tpu_custom_call.1} parent=0
    #allocation2 [shape = 'u8[8192]{0}', space=vmem, size = 0x2000, scoped, tag = 'output window, operand 0']
    #allocation3 [shape = 's32[2]{0}', space=sflag, size = 0x8, scoped, tag = 'scoped memory for tpu_custom_call.1']
    %8 = vsyncpa [#allocation3], 0
    %s9 = scalar_lea.sflag [#allocation3], 1
    %10 = vsyncpa %s9, 0
    loop: start=0, step=1, limit=4
    $region2: #{tpu_custom_call.1} parent=1 // loop_pre_header
      _
    $region3: #{tpu_custom_call.1} parent=1 // loop_header
      %s12 = sphi 0, %s16
      %p13 = scmp.ge.s32.totalorder %s12, 4
      %s22 = sphi 0, %s24
      %s25 = sphi 0, %s22
      %s26 = sphi 0, %s25
      %s42 = sphi 0, %s26
      %s46 = sphi 0, %s46
      %s48 = sphi 0, %s46
      %s49 = sphi 0, %s48
      %s63 = sphi 0, %s49
      %s67 = sphi 0, %s67
      %s69 = sphi 0, %s67
      %s70 = sphi 0, %s69
      %s84 = sphi 0, %s70
      %s90 = sphi 0, %s92
      %s93 = sphi 0, %s90
      %s94 = sphi 0, %s93
      %s110 = sphi 0, %s94
    $region4: #{tpu_custom_call.1} parent=1 // loop_header_branch
      %15 = sbr.rel (%p13) target = $region8
    $region5: #{tpu_custom_call.1} parent=1 // loop_body
      %s17 = ssub.s32 %s12, 1
      %s18 = ssub.s32 %s12, 2
      %s19 = sadd.s32 %s12, 1
      %s20 = ssub.s32 %s12, %s19
      %p21 = scmp.eq.s32.totalorder %s20, 0
      %s23 = sadd.s32 %s22, 1
      %s24 = scalar_select %p21, %s22, %s23
      %p27 = pneg %p21
      %p28 = scmp.eq.s32.totalorder %s12, 1
      %p29 = por %p27, %p28
      %p30 = scmp.ne.s32.totalorder %s22, %s25
      %p31 = scmp.eq.s32.totalorder %s12, 0
      %p32 = por %p30, %p31
      %p33 = scmp.ne.s32.totalorder %s22, %s25
      %p34 = scmp.eq.s32.totalorder %s17, 1
      %p35 = por %p33, %p34
      %p36 = scmp.ne.s32.totalorder %s25, %s26
      %p37 = scmp.eq.s32.totalorder %s17, 0
      %p38 = por %p36, %p37
      %p39 = scmp.ne.s32.totalorder %s25, %s26
      %p40 = scmp.eq.s32.totalorder %s18, 1
      %p41 = por %p39, %p40
      %p43 = scmp.ne.s32.totalorder %s26, %s42
      %p44 = scmp.eq.s32.totalorder %s18, 0
      %p45 = por %p43, %p44
      %s47 = sadd.s32 %s46, 1
      %p50 = scmp.eq.s32.totalorder %s12, 1
      %p51 = scmp.ne.s32.totalorder %s46, %s48
      %p52 = scmp.eq.s32.totalorder %s12, 0
      %p53 = por %p51, %p52
      %p54 = scmp.ne.s32.totalorder %s46, %s48
      %p55 = scmp.eq.s32.totalorder %s17, 1
      %p56 = por %p54, %p55
      %p57 = scmp.ne.s32.totalorder %s48, %s49
      %p58 = scmp.eq.s32.totalorder %s17, 0
      %p59 = por %p57, %p58
      %p60 = scmp.ne.s32.totalorder %s48, %s49
      %p61 = scmp.eq.s32.totalorder %s18, 1
      %p62 = por %p60, %p61
      %p64 = scmp.ne.s32.totalorder %s49, %s63
      %p65 = scmp.eq.s32.totalorder %s18, 0
      %p66 = por %p64, %p65
      %s68 = sadd.s32 %s67, 1
      %p71 = scmp.eq.s32.totalorder %s12, 1
      %p72 = scmp.ne.s32.totalorder %s67, %s69
      %p73 = scmp.eq.s32.totalorder %s12, 0
      %p74 = por %p72, %p73
      %p75 = scmp.ne.s32.totalorder %s67, %s69
      %p76 = scmp.eq.s32.totalorder %s17, 1
      %p77 = por %p75, %p76
      %p78 = scmp.ne.s32.totalorder %s69, %s70
      %p79 = scmp.eq.s32.totalorder %s17, 0
      %p80 = por %p78, %p79
      %p81 = scmp.ne.s32.totalorder %s69, %s70
      %p82 = scmp.eq.s32.totalorder %s18, 1
      %p83 = por %p81, %p82
      %p85 = scmp.ne.s32.totalorder %s70, %s84
      %p86 = scmp.eq.s32.totalorder %s18, 0
      %p87 = por %p85, %p86
      %s88 = ssub.s32 %s12, %s19
      %p89 = scmp.eq.s32.totalorder %s88, 0
      %s91 = sadd.s32 %s90, 1
      %s92 = scalar_select %p89, %s90, %s91
      %p95 = pneg %p89
      %p96 = scmp.eq.s32.totalorder %s12, 1
      %p97 = por %p95, %p96
      %p98 = scmp.ne.s32.totalorder %s90, %s93
      %p99 = scmp.eq.s32.totalorder %s12, 0
      %p100 = por %p98, %p99
      %p101 = scmp.ne.s32.totalorder %s90, %s93
      %p102 = scmp.eq.s32.totalorder %s17, 1
      %p103 = por %p101, %p102
      %p104 = scmp.ne.s32.totalorder %s93, %s94
      %p105 = scmp.eq.s32.totalorder %s17, 0
      %p106 = por %p104, %p105
      %p107 = scmp.ne.s32.totalorder %s93, %s94
      %p108 = scmp.eq.s32.totalorder %s18, 1
      %p109 = por %p107, %p108
      %p111 = scmp.ne.s32.totalorder %s94, %s110
      %p112 = scmp.eq.s32.totalorder %s18, 0
      %p113 = por %p111, %p112
      %p114 = scmp.le.s32.totalorder 1, %s12
      %p115 = scmp.lt.s32.totalorder %s12, 3
      %p116 = pnand %p114, %p115
      %p117 = pneg %p116
      // Predicated region
      $region9: #{tpu_custom_call.1} parent=5 // pred_check
        _
      $region10: #{tpu_custom_call.1} parent=5 // pred_check_branch
        %119 = sbr.rel (%p116) target = $region12
      $region11: #{tpu_custom_call.1} parent=5 // pred_region
        %s120 = ssub.s32 %s12, 1
        // Predicated region
        $region13: #{tpu_custom_call.1} parent=11 // pred_check
          %p121 = pneg %p59
        $region14: #{tpu_custom_call.1} parent=11 // pred_check_branch
          %123 = sbr.rel (%p121) target = $region16
        $region15: #{tpu_custom_call.1} parent=11 // pred_region
          _
        $region16: #{tpu_custom_call.1} parent=11 // pred_fallthru
          _
        // Predicated region
        $region17: #{tpu_custom_call.1} parent=11 // pred_check
          %p124 = pneg %p80
        $region18: #{tpu_custom_call.1} parent=11 // pred_check_branch
          %126 = sbr.rel (%p124) target = $region20
        $region19: #{tpu_custom_call.1} parent=11 // pred_region
          _
        $region20: #{tpu_custom_call.1} parent=11 // pred_fallthru
          _
      $region12: #{tpu_custom_call.1} parent=5 // pred_fallthru
        _
      %p127 = scmp.lt.s32.totalorder %s12, 2
      // Predicated region
      $region21: #{tpu_custom_call.1} parent=5 // pred_check
        %p128 = pneg %p127
      $region22: #{tpu_custom_call.1} parent=5 // pred_check_branch
        %130 = sbr.rel (%p128) target = $region24
      $region23: #{tpu_custom_call.1} parent=5 // pred_region
        // Predicated region
        $region25: #{tpu_custom_call.1} parent=23 // pred_check
          %p131 = pneg %p32
        $region26: #{tpu_custom_call.1} parent=23 // pred_check_branch
          %133 = sbr.rel (%p131) target = $region28
        $region27: #{tpu_custom_call.1} parent=23 // pred_region
          %p134 = scmp.lt.s32.totalorder %s12, 1
          %s135 = scalar_select %p134, %s12, 1
          %s136 = smul.addr %s135, 8
          %s137 = scalar_lea.vmem %s0, %s136
        $region28: #{tpu_custom_call.1} parent=23 // pred_fallthru
          _
      $region24: #{tpu_custom_call.1} parent=5 // pred_fallthru
        _
      %p138 = scmp.le.s32.totalorder 1, %s12
      %p139 = scmp.lt.s32.totalorder %s12, 3
      %p140 = pnand %p138, %p139
      %p141 = pneg %p140
      // Predicated region
      $region29: #{tpu_custom_call.1} parent=5 // pred_check
        _
      $region30: #{tpu_custom_call.1} parent=5 // pred_check_branch
        %143 = sbr.rel (%p140) target = $region32
      $region31: #{tpu_custom_call.1} parent=5 // pred_region
        %s144 = ssub.s32 %s12, 1
        %p145 = scmp.lt.s32.totalorder %s17, 1
        %s146 = scalar_select %p145, %s17, 1
        %s147 = smul.addr %s146, 8
        %s148 = scalar_lea.vmem %s0, %s147
        %p149 = pneg %p38
        %p150 = pneg %p35
        %p151 = pneg %p59
        %p152 = pneg %p56
        %p153 = pneg %p80
        %p154 = pneg %p77
        %p155 = pneg %p106
        %p156 = pneg %p103
        %s157 = sand.u32 %s93, 1
        %s158 = scalar_lea.sflag [#allocation3], %s157
        %s159 = sand.u32 %s93, 1
        %s160 = smul.addr %s159, 8
        %s161 = scalar_lea.vmem [#allocation2], %s160
        %p162 = scmp.lt.s32.totalorder %s17, 1
        %s163 = scalar_select %p162, %s17, 1
        %s164 = smul.addr %s163, 8
        %s165 = scalar_lea.vmem %s0, %s164
        %v166 = vld [vmem:[%s165] sm:$0xff]
        %167 = vadd.xlane.f32.xlu0 %v166
        %v168 = vpop.xlane.xlu0 %167
        %v169 = vrot.slane %v168, 4
        %v170 = vadd.f32 %v168, %v169
        %v171 = vrot.slane %v170, 2
        %v172 = vadd.f32 %v170, %v171
        %v173 = vrot.slane %v172, 1
        %v174 = vadd.f32 %v172, %v173
        %s175 = vtos %v174
        %v176 = vstv %s175
        %v177 = vadd.f32 %v176, 0.0
        %v178 = vmul.f32 %v166, %v166
        %179 = vadd.xlane.f32.xlu0 %v178
        %v180 = vpop.xlane.xlu0 %179
        %v181 = vrot.slane %v180, 4
        %v182 = vadd.f32 %v180, %v181
        %v183 = vrot.slane %v182, 2
        %v184 = vadd.f32 %v182, %v183
        %v185 = vrot.slane %v184, 1
        %v186 = vadd.f32 %v184, %v185
        %s187 = vtos %v186
        %v188 = vstv %s187
        %v189 = vadd.f32 %v188, 0.0
        %v190 = vmul.f32 %v177, 0.0009765625
        %v191 = vmul.f32 %v189, 0.0009765625
        %v192 = vmul.f32 %v190, %v190
        %v193 = vsub.f32 %v191, %v192
        %v194 = vmax.f32 %v193, 0.0
        %v195 = vadd.f32 %v194, 1e-07
        %v196 = vrsqrt.pop %v195
        %v197 = vld [vmem:[%s1] sm:$0xff]
        %v198 = vmul.f32 %v197, %v196
        %v199 = vld [vmem:[%s2] sm:$0xff]
        %v200 = vmul.f32 %v190, %v198
        %v201 = vsub.f32 %v199, %v200
        %203 = vset.pattern.permute.xlu0 0
        %204 = vperm.xlu0 %203, %v198
        %v205 = vpop.permute.xlu0 %204
        %v207 = vmul.f32 %v166, %v205
        %209 = vset.pattern.permute.xlu0 0
        %210 = vperm.xlu0 %209, %v201
        %v211 = vpop.permute.xlu0 %210
        %v213 = vadd.f32 %v207, %v211
        %214 = vst [vmem:[%s161] sm:$0xff] %v213
        %s215 = sand.u32 %s93, 1
        %s216 = scalar_lea.sflag [#allocation3], %s215
        %s217 = sand.u32 %s93, 1
        %s218 = smul.addr %s217, 8
        %s219 = scalar_lea.vmem [#allocation2], %s218
        // Predicated region
        $region33: #{tpu_custom_call.1} parent=31 // pred_check
          %p220 = pneg %p103
        $region34: #{tpu_custom_call.1} parent=31 // pred_check_branch
          %222 = sbr.rel (%p220) target = $region36
        $region35: #{tpu_custom_call.1} parent=31 // pred_region
          %s224 = ssub.s32 128, 128
          %225 = vsyncadd %s216, %s224
          %s226 = smul.addr %s17, 128
          %s227 = scalar_lea.hbm %s3, %s226
          %s229 = sshll.u32 %s219, 4
          %s230 = int_to_ptr.vmem [resolvable:$true] %s229
          %232 = dma.vmem_to_hbm [thread:$0]  %s230, 128, %s227, %s216
        $region36: #{tpu_custom_call.1} parent=31 // pred_fallthru
          _
      $region32: #{tpu_custom_call.1} parent=5 // pred_fallthru
        _
      %p233 = scmp.le.s32.totalorder 2, %s12
      // Predicated region
      $region37: #{tpu_custom_call.1} parent=5 // pred_check
        %p234 = pneg %p233
      $region38: #{tpu_custom_call.1} parent=5 // pred_check_branch
        %236 = sbr.rel (%p234) target = $region40
      $region39: #{tpu_custom_call.1} parent=5 // pred_region
        %s237 = ssub.s32 %s12, 2
        // Predicated region
        $region41: #{tpu_custom_call.1} parent=39 // pred_check
          %p238 = pneg %p109
        $region42: #{tpu_custom_call.1} parent=39 // pred_check_branch
          %240 = sbr.rel (%p238) target = $region44
        $region43: #{tpu_custom_call.1} parent=39 // pred_region
          %s241 = sand.u32 %s94, 1
          %s242 = scalar_lea.sflag [#allocation3], %s241
          %s243 = sand.u32 %s94, 1
          %s244 = smul.addr %s243, 8
          %s245 = scalar_lea.vmem [#allocation2], %s244
          %246 = dma.done %s242, 128
        $region44: #{tpu_custom_call.1} parent=39 // pred_fallthru
          _
      $region40: #{tpu_custom_call.1} parent=5 // pred_fallthru
        _
    $region6: #{tpu_custom_call.1} parent=1 // loop_footer
      %s16 = sadd.s32 1, %s12
    $region7: #{tpu_custom_call.1} parent=1 // loop_footer_branch
      %11 = sbr.rel target = $region3
    $region8: #{tpu_custom_call.1} parent=1 // loop_exit
      _
    %247 = vsyncpa [#allocation3], 1
    %s248 = scalar_lea.sflag [#allocation3], 1
    %249 = vsyncpa %s248, 1

</llo_original>
